<compile_context>
chip_gen: v7x
topology: tpu7x:2x2x1
jax: 0.10.0
libtpu: 0.0.40
codegen_flags: <defaults>
</compile_context>

<pallas_src>
import jax
import jax.numpy as jnp
from jax.experimental import pallas as pl
from jax.experimental.pallas import tpu as pltpu

HIDDEN_DIM = 128
LATENT_DIM = 5
TRAJ_FLAT = 24          # 8 * 3
LANE = 128              # lane-dense slab width
MEAN_OFF = 32           # mean lives at lanes [32, 37)
LV_OFF = 64             # logvar (and eps in the input slab) at lanes [64, 69)
MAX_TILE_B = 1024


def trajvae_kernel(xin_ref, w_ref, c_ref, out_ref):
    """One batch tile of the whole VAE forward.

    xin_ref : (T, 128)      lanes 0:24 = flattened trajectory, 64:69 = eps
    w_ref   : (4, 128, 128) [0]=enc hidden, [1]=fused mean|var head,
                            [2]=dec hidden (rows duplicated at 32:37 & 64:69),
                            [3]=dec out (cols 0:24)
    c_ref   : (8, 128)      rows: b_enc, b_head, b_dec1, b_dec2, scale, shift,
                            latent-slot mask (1.0 at lanes 64:69), zero
    out_ref : (T, 128)      lanes 0:24 = dec, 32:37 = mean, 64:69 = logvar
    """
    xin = xin_ref[...]
    c = c_ref[...]
    b_enc = c[0:1, :]
    b_head = c[1:2, :]
    b_dec1 = c[2:3, :]
    b_dec2 = c[3:4, :]
    scale = c[4:5, :]
    shift = c[5:6, :]
    lv_mask = c[6:7, :]          # 1.0 at the eps/logvar lanes, 0 elsewhere

    # --- Encoder hidden (LeakyReLU 0.01) ---
    h = jnp.dot(xin, w_ref[0], preferred_element_type=jnp.float32) + b_enc
    h = jnp.maximum(h, 0.01 * h)

    # --- Fused mean/var head: mean at lanes 32:37, logvar at lanes 64:69 ---
    head = jnp.dot(h, w_ref[1], preferred_element_type=jnp.float32) + b_head

    # --- Reparameterization, entirely in the padded lane layout ---
    # eps*std lives on the logvar lanes; mask keeps pad lanes exactly 0
    # (exp(0) = 1, 0 * 1 = 0) with no inf*0 hazard.
    eps_std = (xin * lv_mask) * jnp.exp(0.5 * (head * lv_mask))
    z = head * (1.0 - lv_mask) + eps_std   # mean @32:37, eps*std @64:69, else 0

    # --- Decoder hidden (weight rows duplicated -> z @ W == (mean+eps*std) @ dw1)
    d = jnp.dot(z, w_ref[2], preferred_element_type=jnp.float32) + b_dec1
    d = jnp.maximum(d, 0.01 * d)

    # --- Decoder output + tanh + per-coordinate scale/shift (zero on pad lanes)
    o = jnp.tanh(jnp.dot(d, w_ref[3], preferred_element_type=jnp.float32) + b_dec2)
    dec = o * scale + shift                 # zero outside lanes 0:24

    # Single lane-dense 128-wide store: dec + (mean, logvar) from head.
    out_ref[...] = dec + head


def init_raw_params(key):
    """torch-like nn.Linear init; weights stored (in, out) so x @ W + b."""
    ks = jax.random.split(key, 10)

    def linear(kw, kb, fan_in, fan_out):
        bound = 1.0 / jnp.sqrt(jnp.float32(fan_in))
        w = jax.random.uniform(kw, (fan_in, fan_out), jnp.float32, -bound, bound)
        b = jax.random.uniform(kb, (fan_out,), jnp.float32, -bound, bound)
        return w, b

    ew1, eb1 = linear(ks[0], ks[1], TRAJ_FLAT, HIDDEN_DIM)   # encoder.hidden_fc
    mw, mb = linear(ks[2], ks[3], HIDDEN_DIM, LATENT_DIM)    # encoder.mean_fc
    vw, vb = linear(ks[4], ks[5], HIDDEN_DIM, LATENT_DIM)    # encoder.var_fc
    dw1, db1 = linear(ks[6], ks[7], LATENT_DIM, HIDDEN_DIM)  # decoder.hidden_fc
    dw2, db2 = linear(ks[8], ks[9], HIDDEN_DIM, TRAJ_FLAT)   # decoder.decode_fc

    return dict(ew1=ew1, eb1=eb1, mw=mw, mb=mb, vw=vw, vb=vb,
                dw1=dw1, db1=db1, dw2=dw2, db2=db2)


def pack_params(raw):
    """Zero-pad / fuse raw params into the lane-dense kernel layout."""
    f = jnp.float32
    W = jnp.zeros((4, LANE, LANE), f)
    W = W.at[0, 0:TRAJ_FLAT, :].set(raw["ew1"])                      # encoder
    W = W.at[1, :, MEAN_OFF:MEAN_OFF + LATENT_DIM].set(raw["mw"])    # fused head
    W = W.at[1, :, LV_OFF:LV_OFF + LATENT_DIM].set(raw["vw"])
    W = W.at[2, MEAN_OFF:MEAN_OFF + LATENT_DIM, :].set(raw["dw1"])   # dec hidden
    W = W.at[2, LV_OFF:LV_OFF + LATENT_DIM, :].set(raw["dw1"])       # (duplicated)
    W = W.at[3, :, 0:TRAJ_FLAT].set(raw["dw2"])                      # dec out

    C = jnp.zeros((8, LANE), f)
    C = C.at[0, :].set(raw["eb1"])
    C = C.at[1, MEAN_OFF:MEAN_OFF + LATENT_DIM].set(raw["mb"])
    C = C.at[1, LV_OFF:LV_OFF + LATENT_DIM].set(raw["vb"])
    C = C.at[2, :].set(raw["db1"])
    C = C.at[3, 0:TRAJ_FLAT].set(raw["db2"])
    C = C.at[4, 0:TRAJ_FLAT].set(jnp.tile(jnp.array([0.5, 1.0, 0.5], f), 8))
    C = C.at[5, 0:TRAJ_FLAT].set(jnp.tile(jnp.array([0.5, 0.0, 0.5], f), 8))
    C = C.at[6, LV_OFF:LV_OFF + LATENT_DIM].set(1.0)
    return {"w": W, "c": C}


def _round_up(n, m):
    return ((n + m - 1) // m) * m


def trajvae_forward(trajectory, eps, packed):
    """trajectory: (B, 8, 3) f32; eps: (B, 5) f32 standard-normal noise.

    Returns [trajectory_dec, trajectory, logvar, mean] like TrajVAE.forward.
    """
    B = trajectory.shape[0]
    x_flat = trajectory.reshape(B, TRAJ_FLAT).astype(jnp.float32)

    tile_b = min(MAX_TILE_B, _round_up(B, 8))
    b_pad = _round_up(B, tile_b)

    # Lane-dense input slab: x at lanes 0:24, eps at lanes 64:69 (padded rows 0).
    xin = jnp.zeros((b_pad, LANE), jnp.float32)
    xin = xin.at[:B, 0:TRAJ_FLAT].set(x_flat)
    xin = xin.at[:B, LV_OFF:LV_OFF + LATENT_DIM].set(eps.astype(jnp.float32))

    out = pl.pallas_call(
        trajvae_kernel,
        out_shape=jax.ShapeDtypeStruct((b_pad, LANE), jnp.float32),
        grid_spec=pltpu.PrefetchScalarGridSpec(
            num_scalar_prefetch=0,
            grid=(b_pad // tile_b,),
            in_specs=[
                pl.BlockSpec((tile_b, LANE), lambda i: (i, 0)),     # input slab
                pl.BlockSpec((4, LANE, LANE), lambda i: (0, 0, 0)),  # weights (resident)
                pl.BlockSpec((8, LANE), lambda i: (0, 0)),           # constants (resident)
            ],
            out_specs=pl.BlockSpec((tile_b, LANE), lambda i: (i, 0)),
        ),
        compiler_params=pltpu.CompilerParams(
            dimension_semantics=("parallel",)),
    )(xin, packed["w"], packed["c"])

    trajectory_dec = out[:B, 0:TRAJ_FLAT].reshape(B, 8, 3)
    mean = out[:B, MEAN_OFF:MEAN_OFF + LATENT_DIM]
    logvar = out[:B, LV_OFF:LV_OFF + LATENT_DIM]
    return [trajectory_dec, trajectory, logvar, mean]


def trajvae_forward_ref(trajectory, eps, raw):
    """Pure-JAX reference using the raw (unpacked) parameters."""
    B = trajectory.shape[0]
    hp = jax.lax.Precision.HIGHEST
    x = trajectory.reshape(B, TRAJ_FLAT)
    h = jnp.dot(x, raw["ew1"], precision=hp) + raw["eb1"]
    h = jnp.where(h > 0, h, 0.01 * h)
    mean = jnp.dot(h, raw["mw"], precision=hp) + raw["mb"]
    logvar = jnp.dot(h, raw["vw"], precision=hp) + raw["vb"]
    z = mean + eps * jnp.exp(0.5 * logvar)
    d = jnp.dot(z, raw["dw1"], precision=hp) + raw["db1"]
    d = jnp.where(d > 0, d, 0.01 * d)
    o = jnp.tanh(jnp.dot(d, raw["dw2"], precision=hp) + raw["db2"])
    scale = jnp.tile(jnp.array([0.5, 1.0, 0.5], jnp.float32), 8)
    shift = jnp.tile(jnp.array([0.5, 0.0, 0.5], jnp.float32), 8)
    dec = (o * scale + shift).reshape(B, 8, 3)
    return [dec, trajectory, logvar, mean]


if __name__ == "__main__":
    key = jax.random.PRNGKey(0)
    k_param, k_traj, k_eps = jax.random.split(key, 3)

    B = 8
    raw = init_raw_params(k_param)
    packed = pack_params(raw)
    trajectory = jax.random.uniform(k_traj, (B, 8, 3), jnp.float32)
    eps = jax.random.normal(k_eps, (B, LATENT_DIM), jnp.float32)

    out = trajvae_forward(trajectory, eps, packed)
    out = jax.block_until_ready(out)

    ref = trajvae_forward_ref(trajectory, eps, raw)
    for a, b in zip(out, ref):
        assert a.shape == b.shape and a.dtype == b.dtype
        assert jnp.allclose(a, b, atol=1e-4, rtol=1e-4), float(jnp.max(jnp.abs(a - b)))

    assert out[0].shape == (B, 8, 3)
    assert out[2].shape == (B, LATENT_DIM)
    assert out[3].shape == (B, LATENT_DIM)

    print("KERNEL_OK")
</pallas_src>

<mosaic_0001>
module attributes {stable_mosaic.version = 11 : i64} {
  func.func @trajvae_kernel(%arg0: i32, %arg1: memref<8x128xf32, #tpu.memory_space<vmem>>, %arg2: memref<4x128x128xf32, #tpu.memory_space<vmem>>, %arg3: memref<8x128xf32, #tpu.memory_space<vmem>>, %arg4: memref<8x128xf32, #tpu.memory_space<vmem>>) attributes {dimension_semantics = [#tpu.dimension_semantics<parallel>], iteration_bounds = array<i64: 1>, scalar_prefetch = 0 : i64, scratch_operands = 0 : i64, tpu.core_type = #tpu.core_type<tc>, window_params = [{transform_indices = @transform_0, window_bounds = array<i64: 8, 128>}, {pipeline_mode = #tpu.pipeline_mode<synchronous>, transform_indices = @transform_1, window_bounds = array<i64: 4, 128, 128>}, {pipeline_mode = #tpu.pipeline_mode<synchronous>, transform_indices = @transform_2, window_bounds = array<i64: 8, 128>}, {transform_indices = @transform_3, window_bounds = array<i64: 8, 128>}]} {
    %c0 = arith.constant 0 : index
    %c0_0 = arith.constant 0 : index
    %0 = vector.load %arg1[%c0, %c0_0] : memref<8x128xf32, #tpu.memory_space<vmem>>, vector<8x128xf32>
    %c0_1 = arith.constant 0 : index
    %c0_2 = arith.constant 0 : index
    %1 = vector.load %arg3[%c0_1, %c0_2] : memref<8x128xf32, #tpu.memory_space<vmem>>, vector<8x128xf32>
    %2 = vector.extract_strided_slice %1 {offsets = [0, 0], sizes = [1, 128], strides = [1, 1]} : vector<8x128xf32> to vector<1x128xf32>
    %3 = vector.extract_strided_slice %1 {offsets = [1, 0], sizes = [1, 128], strides = [1, 1]} : vector<8x128xf32> to vector<1x128xf32>
    %4 = vector.extract_strided_slice %1 {offsets = [2, 0], sizes = [1, 128], strides = [1, 1]} : vector<8x128xf32> to vector<1x128xf32>
    %5 = vector.extract_strided_slice %1 {offsets = [3, 0], sizes = [1, 128], strides = [1, 1]} : vector<8x128xf32> to vector<1x128xf32>
    %6 = vector.extract_strided_slice %1 {offsets = [4, 0], sizes = [1, 128], strides = [1, 1]} : vector<8x128xf32> to vector<1x128xf32>
    %7 = vector.extract_strided_slice %1 {offsets = [5, 0], sizes = [1, 128], strides = [1, 1]} : vector<8x128xf32> to vector<1x128xf32>
    %8 = vector.extract_strided_slice %1 {offsets = [6, 0], sizes = [1, 128], strides = [1, 1]} : vector<8x128xf32> to vector<1x128xf32>
    %c0_3 = arith.constant 0 : index
    %c0_4 = arith.constant 0 : index
    %c0_5 = arith.constant 0 : index
    %9 = vector.load %arg2[%c0_3, %c0_4, %c0_5] : memref<4x128x128xf32, #tpu.memory_space<vmem>>, vector<1x128x128xf32>
    %10 = vector.shape_cast %9 : vector<1x128x128xf32> to vector<128x128xf32>
    %cst = arith.constant dense<0.000000e+00> : vector<8x128xf32>
    %11 = tpu.matmul %0, %10, %cst {dimension_numbers = #tpu.dot_dimension_numbers<[1], [0], [0], [1], [0, 0, 1, 1], [], []>} : vector<8x128xf32>, vector<128x128xf32>, vector<8x128xf32> -> vector<8x128xf32>
    %12 = vector.broadcast %2 : vector<1x128xf32> to vector<8x128xf32>
    %13 = arith.addf %11, %12 : vector<8x128xf32>
    %cst_6 = arith.constant 0.00999999977 : f32
    %14 = vector.broadcast %cst_6 : f32 to vector<8x128xf32>
    %15 = arith.mulf %14, %13 : vector<8x128xf32>
    %16 = arith.maximumf %13, %15 : vector<8x128xf32>
    %c1 = arith.constant 1 : index
    %c0_7 = arith.constant 0 : index
    %c0_8 = arith.constant 0 : index
    %17 = vector.load %arg2[%c1, %c0_7, %c0_8] : memref<4x128x128xf32, #tpu.memory_space<vmem>>, vector<1x128x128xf32>
    %18 = vector.shape_cast %17 : vector<1x128x128xf32> to vector<128x128xf32>
    %cst_9 = arith.constant dense<0.000000e+00> : vector<8x128xf32>
    %19 = tpu.matmul %16, %18, %cst_9 {dimension_numbers = #tpu.dot_dimension_numbers<[1], [0], [0], [1], [0, 0, 1, 1], [], []>} : vector<8x128xf32>, vector<128x128xf32>, vector<8x128xf32> -> vector<8x128xf32>
    %20 = vector.broadcast %3 : vector<1x128xf32> to vector<8x128xf32>
    %21 = arith.addf %19, %20 : vector<8x128xf32>
    %22 = vector.broadcast %8 : vector<1x128xf32> to vector<8x128xf32>
    %23 = arith.mulf %0, %22 : vector<8x128xf32>
    %24 = vector.broadcast %8 : vector<1x128xf32> to vector<8x128xf32>
    %25 = arith.mulf %21, %24 : vector<8x128xf32>
    %cst_10 = arith.constant 5.000000e-01 : f32
    %26 = vector.broadcast %cst_10 : f32 to vector<8x128xf32>
    %27 = arith.mulf %26, %25 : vector<8x128xf32>
    %28 = math.exp %27 : vector<8x128xf32>
    %29 = arith.mulf %23, %28 : vector<8x128xf32>
    %cst_11 = arith.constant 1.000000e+00 : f32
    %30 = vector.broadcast %cst_11 : f32 to vector<1x128xf32>
    %31 = arith.subf %30, %8 : vector<1x128xf32>
    %32 = vector.broadcast %31 : vector<1x128xf32> to vector<8x128xf32>
    %33 = arith.mulf %21, %32 : vector<8x128xf32>
    %34 = arith.addf %33, %29 : vector<8x128xf32>
    %c2 = arith.constant 2 : index
    %c0_12 = arith.constant 0 : index
    %c0_13 = arith.constant 0 : index
    %35 = vector.load %arg2[%c2, %c0_12, %c0_13] : memref<4x128x128xf32, #tpu.memory_space<vmem>>, vector<1x128x128xf32>
    %36 = vector.shape_cast %35 : vector<1x128x128xf32> to vector<128x128xf32>
    %cst_14 = arith.constant dense<0.000000e+00> : vector<8x128xf32>
    %37 = tpu.matmul %34, %36, %cst_14 {dimension_numbers = #tpu.dot_dimension_numbers<[1], [0], [0], [1], [0, 0, 1, 1], [], []>} : vector<8x128xf32>, vector<128x128xf32>, vector<8x128xf32> -> vector<8x128xf32>
    %38 = vector.broadcast %4 : vector<1x128xf32> to vector<8x128xf32>
    %39 = arith.addf %37, %38 : vector<8x128xf32>
    %cst_15 = arith.constant 0.00999999977 : f32
    %40 = vector.broadcast %cst_15 : f32 to vector<8x128xf32>
    %41 = arith.mulf %40, %39 : vector<8x128xf32>
    %42 = arith.maximumf %39, %41 : vector<8x128xf32>
    %c3 = arith.constant 3 : index
    %c0_16 = arith.constant 0 : index
    %c0_17 = arith.constant 0 : index
    %43 = vector.load %arg2[%c3, %c0_16, %c0_17] : memref<4x128x128xf32, #tpu.memory_space<vmem>>, vector<1x128x128xf32>
    %44 = vector.shape_cast %43 : vector<1x128x128xf32> to vector<128x128xf32>
    %cst_18 = arith.constant dense<0.000000e+00> : vector<8x128xf32>
    %45 = tpu.matmul %42, %44, %cst_18 {dimension_numbers = #tpu.dot_dimension_numbers<[1], [0], [0], [1], [0, 0, 1, 1], [], []>} : vector<8x128xf32>, vector<128x128xf32>, vector<8x128xf32> -> vector<8x128xf32>
    %46 = vector.broadcast %5 : vector<1x128xf32> to vector<8x128xf32>
    %47 = arith.addf %45, %46 : vector<8x128xf32>
    %48 = math.tanh %47 : vector<8x128xf32>
    %49 = vector.broadcast %6 : vector<1x128xf32> to vector<8x128xf32>
    %50 = arith.mulf %48, %49 : vector<8x128xf32>
    %51 = vector.broadcast %7 : vector<1x128xf32> to vector<8x128xf32>
    %52 = arith.addf %50, %51 : vector<8x128xf32>
    %53 = arith.addf %52, %21 : vector<8x128xf32>
    %c0_19 = arith.constant 0 : index
    %c0_20 = arith.constant 0 : index
    %54 = vector.load %arg4[%c0_19, %c0_20] : memref<8x128xf32, #tpu.memory_space<vmem>>, vector<8x128xf32>
    tpu.vector_store %arg4[%c0_19, %c0_20], %53 {strides = array<i32>} : memref<8x128xf32, #tpu.memory_space<vmem>>, vector<8x128xf32>,
    return
  }
  func.func @transform_0(%arg0: i32) -> (i32, i32) {
    %c0_i32 = arith.constant 0 : i32
    %c0_i32_0 = arith.constant 0 : i32
    return %arg0, %c0_i32 : i32, i32
  }
  func.func @transform_1(%arg0: i32) -> (i32, i32, i32) {
    %c0_i32 = arith.constant 0 : i32
    %c0_i32_0 = arith.constant 0 : i32
    %c0_i32_1 = arith.constant 0 : i32
    %c0_i32_2 = arith.constant 0 : i32
    return %c0_i32, %c0_i32_0, %c0_i32_1 : i32, i32, i32
  }
  func.func @transform_2(%arg0: i32) -> (i32, i32) {
    %c0_i32 = arith.constant 0 : i32
    %c0_i32_0 = arith.constant 0 : i32
    %c0_i32_1 = arith.constant 0 : i32
    return %c0_i32, %c0_i32_0 : i32, i32
  }
  func.func @transform_3(%arg0: i32) -> (i32, i32) {
    %c0_i32 = arith.constant 0 : i32
    %c0_i32_0 = arith.constant 0 : i32
    return %arg0, %c0_i32 : i32, i32
  }
}

</mosaic_0001>

<llo_original>
// kernel: tpu_custom_call.1
$region0: #{tpu_custom_call.1}
  #allocation0 [shape = 'u32[]', space=smem, size = 0x4, offset = 0x4, fixed_abs, tag = 'smem constant byte address 0x4 - core index']
  #allocation1 [shape = 'u32[144,128]{1,0:T(1,128)}', space=vmem, size = 0x12000, scoped, tag = 'internal scratch']
  %s0 = inlined_call_operand.hbm [shape: f32[8,128], index: 0, kind: input, shape index: {}]
  %s1 = inlined_call_operand.hbm [shape: f32[4,128,128], index: 1, kind: input, shape index: {}]
  %s2 = inlined_call_operand.hbm [shape: f32[8,128], index: 2, kind: input, shape index: {}]
  %s3 = inlined_call_operand.hbm [shape: f32[8,128], index: 3, kind: output, shape index: {}]
  %s4 = sld [smem:[#allocation0]]
  $region34: #{tpu_custom_call.1} parent=0
    _
  %s6 = ssub.s32 1, %s4
  %s7 = scalar_select 0, %s6, %s4
  $region1: #{tpu_custom_call.1} parent=0
    #allocation2 [shape = 'u8[4096]{0}', space=vmem, size = 0x1000, scoped, tag = 'input window, operand 0, single buffered']
    #allocation3 [shape = 's32[1]{0}', space=sflag, size = 0x4, scoped, tag = 'scoped memory for tpu_custom_call.1']
    #allocation4 [shape = 's32[1]{0}', space=sflag, size = 0x4, scoped, tag = 'scoped memory for tpu_custom_call.1']
    #allocation5 [shape = 'u8[262144]{0}', space=vmem, size = 0x40000, scoped, tag = 'input window, operand 1, single buffered']
    #allocation6 [shape = 's32[1]{0}', space=sflag, size = 0x4, scoped, tag = 'scoped memory for tpu_custom_call.1']
    #allocation7 [shape = 'u8[4096]{0}', space=vmem, size = 0x1000, scoped, tag = 'input window, operand 2, single buffered']
    #allocation8 [shape = 'u8[4096]{0}', space=vmem, size = 0x1000, scoped, tag = 'output window, operand 0, single buffered']
    %8 = vsyncpa [#allocation3], 0
    %9 = vsyncpa [#allocation6], 0
    %10 = vsyncpa [#allocation4], 0
    // Predicated region
    $region2: #{tpu_custom_call.1} parent=1 // pred_check
      _
    $region3: #{tpu_custom_call.1} parent=1 // pred_check_branch
      %12 = sbr.rel (0) target = $region5
    $region4: #{tpu_custom_call.1} parent=1 // pred_region
      %s14 = ssub.s32 128, 128
      %15 = vsyncadd [#allocation3], %s14
      %s17 = sshll.u32 [#allocation2], 4
      %s18 = int_to_ptr.vmem [resolvable:$true] %s17
      %20 = dma.hbm_to_vmem [thread:$0]  %s0, 128, %s18, [#allocation3]
    $region5: #{tpu_custom_call.1} parent=1 // pred_fallthru
      _
    // Predicated region
    $region6: #{tpu_custom_call.1} parent=1 // pred_check
      _
    $region7: #{tpu_custom_call.1} parent=1 // pred_check_branch
      %22 = sbr.rel (0) target = $region9
    $region8: #{tpu_custom_call.1} parent=1 // pred_region
      %s24 = ssub.s32 8192, 8192
      %25 = vsyncadd [#allocation6], %s24
      %s26 = sshll.u32 [#allocation5], 4
      %s27 = int_to_ptr.vmem [resolvable:$true] %s26
      %32 = dma.hbm_to_vmem [thread:$0]  %s1, 8192, %s27, [#allocation6], 128, 128, 8
    $region9: #{tpu_custom_call.1} parent=1 // pred_fallthru
      _
    // Predicated region
    $region10: #{tpu_custom_call.1} parent=1 // pred_check
      _
    $region11: #{tpu_custom_call.1} parent=1 // pred_check_branch
      %34 = sbr.rel (0) target = $region13
    $region12: #{tpu_custom_call.1} parent=1 // pred_region
      %s36 = ssub.s32 128, 128
      %37 = vsyncadd [#allocation6], %s36
      %s39 = sshll.u32 [#allocation7], 4
      %s40 = int_to_ptr.vmem [resolvable:$true] %s39
      %42 = dma.hbm_to_vmem [thread:$0]  %s2, 128, %s40, [#allocation6]
    $region13: #{tpu_custom_call.1} parent=1 // pred_fallthru
      _
    // Predicated region
    $region14: #{tpu_custom_call.1} parent=1 // pred_check
      _
    $region15: #{tpu_custom_call.1} parent=1 // pred_check_branch
      %44 = sbr.rel (0) target = $region17
    $region16: #{tpu_custom_call.1} parent=1 // pred_region
      %45 = dma.done [#allocation3], 128
    $region17: #{tpu_custom_call.1} parent=1 // pred_fallthru
      _
    // Predicated region
    $region18: #{tpu_custom_call.1} parent=1 // pred_check
      _
    $region19: #{tpu_custom_call.1} parent=1 // pred_check_branch
      %47 = sbr.rel (0) target = $region21
    $region20: #{tpu_custom_call.1} parent=1 // pred_region
      %48 = dma.done [#allocation6], 8192
    $region21: #{tpu_custom_call.1} parent=1 // pred_fallthru
      _
    // Predicated region
    $region22: #{tpu_custom_call.1} parent=1 // pred_check
      _
    $region23: #{tpu_custom_call.1} parent=1 // pred_check_branch
      %50 = sbr.rel (0) target = $region25
    $region24: #{tpu_custom_call.1} parent=1 // pred_region
      %51 = dma.done [#allocation6], 128
    $region25: #{tpu_custom_call.1} parent=1 // pred_fallthru
      _
    %v52 = vld [vmem:[#allocation2] sm:$0xff]
    %v53 = vld [vmem:[#allocation7] sm:$0xff]
    %v54 = vld [vmem:[#allocation5] sm:$0xff]
    %v55 = vld [vmem:[#allocation5 + $0x8] sm:$0xff]
    %v56 = vld [vmem:[#allocation5 + $0x10] sm:$0xff]
    %v57 = vld [vmem:[#allocation5 + $0x18] sm:$0xff]
    %v58 = vld [vmem:[#allocation5 + $0x20] sm:$0xff]
    %v59 = vld [vmem:[#allocation5 + $0x28] sm:$0xff]
    %v60 = vld [vmem:[#allocation5 + $0x30] sm:$0xff]
    %v61 = vld [vmem:[#allocation5 + $0x38] sm:$0xff]
    %v62 = vld [vmem:[#allocation5 + $0x40] sm:$0xff]
    %v63 = vld [vmem:[#allocation5 + $0x48] sm:$0xff]
    %v64 = vld [vmem:[#allocation5 + $0x50] sm:$0xff]
    %v65 = vld [vmem:[#allocation5 + $0x58] sm:$0xff]
    %v66 = vld [vmem:[#allocation5 + $0x60] sm:$0xff]
    %v67 = vld [vmem:[#allocation5 + $0x68] sm:$0xff]
    %v68 = vld [vmem:[#allocation5 + $0x70] sm:$0xff]
    %v69 = vld [vmem:[#allocation5 + $0x78] sm:$0xff]
    %v70 = vlaneseq
    %v71 = vshrl.u32 %v70, 7
    %v72 = vsub.s32 0, %v71
    %v73 = vrot.slane %v53, %v72
    %74 = vmatprep.subr.mxu0 0.0
    %75 = vmatpush1.msra.mxu0 %v54
    %76 = vmatprep.subr.mxu0 0.0
    %77 = vmatpush1.msra.mxu0 %v55
    %78 = vmatprep.subr.mxu0 0.0
    %79 = vmatpush1.msra.mxu0 %v56
    %80 = vmatprep.subr.mxu0 0.0
    %81 = vmatpush1.msra.mxu0 %v57
    %82 = vmatprep.subr.mxu0 0.0
    %83 = vmatpush1.msra.mxu0 %v58
    %84 = vmatprep.subr.mxu0 0.0
    %85 = vmatpush1.msra.mxu0 %v59
    %86 = vmatprep.subr.mxu0 0.0
    %87 = vmatpush1.msra.mxu0 %v60
    %88 = vmatprep.subr.mxu0 0.0
    %89 = vmatpush1.msra.mxu0 %v61
    %90 = vmatprep.subr.mxu0 0.0
    %91 = vmatpush1.msra.mxu0 %v62
    %92 = vmatprep.subr.mxu0 0.0
    %93 = vmatpush1.msra.mxu0 %v63
    %94 = vmatprep.subr.mxu0 0.0
    %95 = vmatpush1.msra.mxu0 %v64
    %96 = vmatprep.subr.mxu0 0.0
    %97 = vmatpush1.msra.mxu0 %v65
    %98 = vmatprep.subr.mxu0 0.0
    %99 = vmatpush1.msra.mxu0 %v66
    %100 = vmatprep.subr.mxu0 0.0
    %101 = vmatpush1.msra.mxu0 %v67
    %102 = vmatprep.subr.mxu0 0.0
    %103 = vmatpush1.msra.mxu0 %v68
    %104 = vmatprep.subr.mxu0 0.0
    %105 = vmatpush1.msra.mxu0 %v69
    %106 = vmatprep.subr.mxu0 0.0
    %107 = vmatpush1.msra.mxu0 0.0
    %108 = vmatprep.subr.mxu0 0.0
    %109 = vmatpush1.msra.mxu0 0.0
    %110 = vmatprep.subr.mxu0 0.0
    %111 = vmatpush1.msra.mxu0 0.0
    %112 = vmatprep.subr.mxu0 0.0
    %113 = vmatpush1.msra.mxu0 0.0
    %114 = vmatprep.subr.mxu0 0.0
    %115 = vmatpush1.msra.mxu0 0.0
    %116 = vmatprep.subr.mxu0 0.0
    %117 = vmatpush1.msra.mxu0 0.0
    %118 = vmatprep.subr.mxu0 0.0
    %119 = vmatpush1.msra.mxu0 0.0
    %120 = vmatprep.subr.mxu0 0.0
    %121 = vmatpush1.msra.mxu0 0.0
    %122 = vmatprep.subr.mxu0 0.0
    %123 = vmatpush1.msra.mxu0 0.0
    %124 = vmatprep.subr.mxu0 0.0
    %125 = vmatpush1.msra.mxu0 0.0
    %126 = vmatprep.subr.mxu0 0.0
    %127 = vmatpush1.msra.mxu0 0.0
    %128 = vmatprep.subr.mxu0 0.0
    %129 = vmatpush1.msra.mxu0 0.0
    %130 = vmatprep.subr.mxu0 0.0
    %131 = vmatpush1.msra.mxu0 0.0
    %132 = vmatprep.subr.mxu0 0.0
    %133 = vmatpush1.msra.mxu0 0.0
    %134 = vmatprep.subr.mxu0 0.0
    %135 = vmatpush1.msra.mxu0 0.0
    %136 = vmatprep.subr.mxu0 0.0
    %137 = vmatpush1.msra.mxu0 0.0
    %138 = vmatprep.mubr.f32.mxu0 0.0
    %139 = vmatmul.mubr.f32.gmra.mrb[0].mxu0 %v52
    %v140 = vpop.f32.mrb[0].mxu0
    %v141 = vadd.f32 %v73, %v140
    %v142 = vpop.f32.mrb[0].mxu0
    %143 = vdwg.mxu0
    %v144 = vmul.f32 %v141, 0.01
    %v145 = vmax.f32 %v141, %v144
    %s146 = scalar_lea.vmem [#allocation5], 128
    %v147 = vld [vmem:[%s146] sm:$0xff]
    %v148 = vld [vmem:[%s146 + $0x8] sm:$0xff]
    %v149 = vld [vmem:[%s146 + $0x10] sm:$0xff]
    %v150 = vld [vmem:[%s146 + $0x18] sm:$0xff]
    %v151 = vld [vmem:[%s146 + $0x20] sm:$0xff]
    %v152 = vld [vmem:[%s146 + $0x28] sm:$0xff]
    %v153 = vld [vmem:[%s146 + $0x30] sm:$0xff]
    %v154 = vld [vmem:[%s146 + $0x38] sm:$0xff]
    %v155 = vld [vmem:[%s146 + $0x40] sm:$0xff]
    %v156 = vld [vmem:[%s146 + $0x48] sm:$0xff]
    %v157 = vld [vmem:[%s146 + $0x50] sm:$0xff]
    %v158 = vld [vmem:[%s146 + $0x58] sm:$0xff]
    %v159 = vld [vmem:[%s146 + $0x60] sm:$0xff]
    %v160 = vld [vmem:[%s146 + $0x68] sm:$0xff]
    %v161 = vld [vmem:[%s146 + $0x70] sm:$0xff]
    %v162 = vld [vmem:[%s146 + $0x78] sm:$0xff]
    %v163 = vlaneseq
    %v164 = vshrl.u32 %v163, 7
    %v165 = vsub.s32 1, %v164
    %v166 = vrot.slane %v53, %v165
    %167 = vmatprep.subr.mxu0 0.0
    %168 = vmatpush1.msra.mxu0 %v147
    %169 = vmatprep.subr.mxu0 0.0
    %170 = vmatpush1.msra.mxu0 %v148
    %171 = vmatprep.subr.mxu0 0.0
    %172 = vmatpush1.msra.mxu0 %v149
    %173 = vmatprep.subr.mxu0 0.0
    %174 = vmatpush1.msra.mxu0 %v150
    %175 = vmatprep.subr.mxu0 0.0
    %176 = vmatpush1.msra.mxu0 %v151
    %177 = vmatprep.subr.mxu0 0.0
    %178 = vmatpush1.msra.mxu0 %v152
    %179 = vmatprep.subr.mxu0 0.0
    %180 = vmatpush1.msra.mxu0 %v153
    %181 = vmatprep.subr.mxu0 0.0
    %182 = vmatpush1.msra.mxu0 %v154
    %183 = vmatprep.subr.mxu0 0.0
    %184 = vmatpush1.msra.mxu0 %v155
    %185 = vmatprep.subr.mxu0 0.0
    %186 = vmatpush1.msra.mxu0 %v156
    %187 = vmatprep.subr.mxu0 0.0
    %188 = vmatpush1.msra.mxu0 %v157
    %189 = vmatprep.subr.mxu0 0.0
    %190 = vmatpush1.msra.mxu0 %v158
    %191 = vmatprep.subr.mxu0 0.0
    %192 = vmatpush1.msra.mxu0 %v159
    %193 = vmatprep.subr.mxu0 0.0
    %194 = vmatpush1.msra.mxu0 %v160
    %195 = vmatprep.subr.mxu0 0.0
    %196 = vmatpush1.msra.mxu0 %v161
    %197 = vmatprep.subr.mxu0 0.0
    %198 = vmatpush1.msra.mxu0 %v162
    %199 = vmatprep.subr.mxu0 0.0
    %200 = vmatpush1.msra.mxu0 0.0
    %201 = vmatprep.subr.mxu0 0.0
    %202 = vmatpush1.msra.mxu0 0.0
    %203 = vmatprep.subr.mxu0 0.0
    %204 = vmatpush1.msra.mxu0 0.0
    %205 = vmatprep.subr.mxu0 0.0
    %206 = vmatpush1.msra.mxu0 0.0
    %207 = vmatprep.subr.mxu0 0.0
    %208 = vmatpush1.msra.mxu0 0.0
    %209 = vmatprep.subr.mxu0 0.0
    %210 = vmatpush1.msra.mxu0 0.0
    %211 = vmatprep.subr.mxu0 0.0
    %212 = vmatpush1.msra.mxu0 0.0
    %213 = vmatprep.subr.mxu0 0.0
    %214 = vmatpush1.msra.mxu0 0.0
    %215 = vmatprep.subr.mxu0 0.0
    %216 = vmatpush1.msra.mxu0 0.0
    %217 = vmatprep.subr.mxu0 0.0
    %218 = vmatpush1.msra.mxu0 0.0
    %219 = vmatprep.subr.mxu0 0.0
    %220 = vmatpush1.msra.mxu0 0.0
    %221 = vmatprep.subr.mxu0 0.0
    %222 = vmatpush1.msra.mxu0 0.0
    %223 = vmatprep.subr.mxu0 0.0
    %224 = vmatpush1.msra.mxu0 0.0
    %225 = vmatprep.subr.mxu0 0.0
    %226 = vmatpush1.msra.mxu0 0.0
    %227 = vmatprep.subr.mxu0 0.0
    %228 = vmatpush1.msra.mxu0 0.0
    %229 = vmatprep.subr.mxu0 0.0
    %230 = vmatpush1.msra.mxu0 0.0
    %231 = vmatprep.mubr.f32.mxu0 0.0
    %232 = vmatmul.mubr.f32.gmra.mrb[0].mxu0 %v145
    %v233 = vpop.f32.mrb[0].mxu0
    %v234 = vadd.f32 %v166, %v233
    %v235 = vpop.f32.mrb[0].mxu0
    %236 = vdwg.mxu0
    %v237 = vlaneseq
    %v238 = vshrl.u32 %v237, 7
    %v239 = vsub.s32 6, %v238
    %v240 = vrot.slane %v53, %v239
    %v241 = vmul.f32 %v52, %v240
    %v242 = vmul.f32 %v234, %v240
    %v243 = vmul.f32 %v242, 0.5
    %v244 = vmul.f32 %v243, 1.442695
    %v245 = vpow.pop %v244
    %v246 = vmul.f32 %v241, %v245
    %v247 = vsub.f32 1.0, %v53
    %v248 = vlaneseq
    %v249 = vshrl.u32 %v248, 7
    %v250 = vsub.s32 6, %v249
    %v251 = vrot.slane %v247, %v250
    %v252 = vmul.f32 %v234, %v251
    %v253 = vadd.f32 %v252, %v246
    %s254 = scalar_lea.vmem [#allocation5], 256
    %v255 = vld [vmem:[%s254] sm:$0xff]
    %v256 = vld [vmem:[%s254 + $0x8] sm:$0xff]
    %v257 = vld [vmem:[%s254 + $0x10] sm:$0xff]
    %v258 = vld [vmem:[%s254 + $0x18] sm:$0xff]
    %v259 = vld [vmem:[%s254 + $0x20] sm:$0xff]
    %v260 = vld [vmem:[%s254 + $0x28] sm:$0xff]
    %v261 = vld [vmem:[%s254 + $0x30] sm:$0xff]
    %v262 = vld [vmem:[%s254 + $0x38] sm:$0xff]
    %v263 = vld [vmem:[%s254 + $0x40] sm:$0xff]
    %v264 = vld [vmem:[%s254 + $0x48] sm:$0xff]
    %v265 = vld [vmem:[%s254 + $0x50] sm:$0xff]
    %v266 = vld [vmem:[%s254 + $0x58] sm:$0xff]
    %v267 = vld [vmem:[%s254 + $0x60] sm:$0xff]
    %v268 = vld [vmem:[%s254 + $0x68] sm:$0xff]
    %v269 = vld [vmem:[%s254 + $0x70] sm:$0xff]
    %v270 = vld [vmem:[%s254 + $0x78] sm:$0xff]
    %v271 = vlaneseq
    %v272 = vshrl.u32 %v271, 7
    %v273 = vsub.s32 2, %v272
    %v274 = vrot.slane %v53, %v273
    %275 = vmatprep.subr.mxu0 0.0
    %276 = vmatpush1.msra.mxu0 %v255
    %277 = vmatprep.subr.mxu0 0.0
    %278 = vmatpush1.msra.mxu0 %v256
    %279 = vmatprep.subr.mxu0 0.0
    %280 = vmatpush1.msra.mxu0 %v257
    %281 = vmatprep.subr.mxu0 0.0
    %282 = vmatpush1.msra.mxu0 %v258
    %283 = vmatprep.subr.mxu0 0.0
    %284 = vmatpush1.msra.mxu0 %v259
    %285 = vmatprep.subr.mxu0 0.0
    %286 = vmatpush1.msra.mxu0 %v260
    %287 = vmatprep.subr.mxu0 0.0
    %288 = vmatpush1.msra.mxu0 %v261
    %289 = vmatprep.subr.mxu0 0.0
    %290 = vmatpush1.msra.mxu0 %v262
    %291 = vmatprep.subr.mxu0 0.0
    %292 = vmatpush1.msra.mxu0 %v263
    %293 = vmatprep.subr.mxu0 0.0
    %294 = vmatpush1.msra.mxu0 %v264
    %295 = vmatprep.subr.mxu0 0.0
    %296 = vmatpush1.msra.mxu0 %v265
    %297 = vmatprep.subr.mxu0 0.0
    %298 = vmatpush1.msra.mxu0 %v266
    %299 = vmatprep.subr.mxu0 0.0
    %300 = vmatpush1.msra.mxu0 %v267
    %301 = vmatprep.subr.mxu0 0.0
    %302 = vmatpush1.msra.mxu0 %v268
    %303 = vmatprep.subr.mxu0 0.0
    %304 = vmatpush1.msra.mxu0 %v269
    %305 = vmatprep.subr.mxu0 0.0
    %306 = vmatpush1.msra.mxu0 %v270
    %307 = vmatprep.subr.mxu0 0.0
    %308 = vmatpush1.msra.mxu0 0.0
    %309 = vmatprep.subr.mxu0 0.0
    %310 = vmatpush1.msra.mxu0 0.0
    %311 = vmatprep.subr.mxu0 0.0
    %312 = vmatpush1.msra.mxu0 0.0
    %313 = vmatprep.subr.mxu0 0.0
    %314 = vmatpush1.msra.mxu0 0.0
    %315 = vmatprep.subr.mxu0 0.0
    %316 = vmatpush1.msra.mxu0 0.0
    %317 = vmatprep.subr.mxu0 0.0
    %318 = vmatpush1.msra.mxu0 0.0
    %319 = vmatprep.subr.mxu0 0.0
    %320 = vmatpush1.msra.mxu0 0.0
    %321 = vmatprep.subr.mxu0 0.0
    %322 = vmatpush1.msra.mxu0 0.0
    %323 = vmatprep.subr.mxu0 0.0
    %324 = vmatpush1.msra.mxu0 0.0
    %325 = vmatprep.subr.mxu0 0.0
    %326 = vmatpush1.msra.mxu0 0.0
    %327 = vmatprep.subr.mxu0 0.0
    %328 = vmatpush1.msra.mxu0 0.0
    %329 = vmatprep.subr.mxu0 0.0
    %330 = vmatpush1.msra.mxu0 0.0
    %331 = vmatprep.subr.mxu0 0.0
    %332 = vmatpush1.msra.mxu0 0.0
    %333 = vmatprep.subr.mxu0 0.0
    %334 = vmatpush1.msra.mxu0 0.0
    %335 = vmatprep.subr.mxu0 0.0
    %336 = vmatpush1.msra.mxu0 0.0
    %337 = vmatprep.subr.mxu0 0.0
    %338 = vmatpush1.msra.mxu0 0.0
    %339 = vmatprep.mubr.f32.mxu0 0.0
    %340 = vmatmul.mubr.f32.gmra.mrb[0].mxu0 %v253
    %v341 = vpop.f32.mrb[0].mxu0
    %v342 = vadd.f32 %v274, %v341
    %v343 = vpop.f32.mrb[0].mxu0
    %344 = vdwg.mxu0
    %v345 = vmul.f32 %v342, 0.01
    %v346 = vmax.f32 %v342, %v345
    %s347 = scalar_lea.vmem [#allocation5], 384
    %v348 = vld [vmem:[%s347] sm:$0xff]
    %v349 = vld [vmem:[%s347 + $0x8] sm:$0xff]
    %v350 = vld [vmem:[%s347 + $0x10] sm:$0xff]
    %v351 = vld [vmem:[%s347 + $0x18] sm:$0xff]
    %v352 = vld [vmem:[%s347 + $0x20] sm:$0xff]
    %v353 = vld [vmem:[%s347 + $0x28] sm:$0xff]
    %v354 = vld [vmem:[%s347 + $0x30] sm:$0xff]
    %v355 = vld [vmem:[%s347 + $0x38] sm:$0xff]
    %v356 = vld [vmem:[%s347 + $0x40] sm:$0xff]
    %v357 = vld [vmem:[%s347 + $0x48] sm:$0xff]
    %v358 = vld [vmem:[%s347 + $0x50] sm:$0xff]
    %v359 = vld [vmem:[%s347 + $0x58] sm:$0xff]
    %v360 = vld [vmem:[%s347 + $0x60] sm:$0xff]
    %v361 = vld [vmem:[%s347 + $0x68] sm:$0xff]
    %v362 = vld [vmem:[%s347 + $0x70] sm:$0xff]
    %v363 = vld [vmem:[%s347 + $0x78] sm:$0xff]
    %v364 = vlaneseq
    %v365 = vshrl.u32 %v364, 7
    %v366 = vsub.s32 3, %v365
    %v367 = vrot.slane %v53, %v366
    %368 = vmatprep.subr.mxu0 0.0
    %369 = vmatpush1.msra.mxu0 %v348
    %370 = vmatprep.subr.mxu0 0.0
    %371 = vmatpush1.msra.mxu0 %v349
    %372 = vmatprep.subr.mxu0 0.0
    %373 = vmatpush1.msra.mxu0 %v350
    %374 = vmatprep.subr.mxu0 0.0
    %375 = vmatpush1.msra.mxu0 %v351
    %376 = vmatprep.subr.mxu0 0.0
    %377 = vmatpush1.msra.mxu0 %v352
    %378 = vmatprep.subr.mxu0 0.0
    %379 = vmatpush1.msra.mxu0 %v353
    %380 = vmatprep.subr.mxu0 0.0
    %381 = vmatpush1.msra.mxu0 %v354
    %382 = vmatprep.subr.mxu0 0.0
    %383 = vmatpush1.msra.mxu0 %v355
    %384 = vmatprep.subr.mxu0 0.0
    %385 = vmatpush1.msra.mxu0 %v356
    %386 = vmatprep.subr.mxu0 0.0
    %387 = vmatpush1.msra.mxu0 %v357
    %388 = vmatprep.subr.mxu0 0.0
    %389 = vmatpush1.msra.mxu0 %v358
    %390 = vmatprep.subr.mxu0 0.0
    %391 = vmatpush1.msra.mxu0 %v359
    %392 = vmatprep.subr.mxu0 0.0
    %393 = vmatpush1.msra.mxu0 %v360
    %394 = vmatprep.subr.mxu0 0.0
    %395 = vmatpush1.msra.mxu0 %v361
    %396 = vmatprep.subr.mxu0 0.0
    %397 = vmatpush1.msra.mxu0 %v362
    %398 = vmatprep.subr.mxu0 0.0
    %399 = vmatpush1.msra.mxu0 %v363
    %400 = vmatprep.subr.mxu0 0.0
    %401 = vmatpush1.msra.mxu0 0.0
    %402 = vmatprep.subr.mxu0 0.0
    %403 = vmatpush1.msra.mxu0 0.0
    %404 = vmatprep.subr.mxu0 0.0
    %405 = vmatpush1.msra.mxu0 0.0
    %406 = vmatprep.subr.mxu0 0.0
    %407 = vmatpush1.msra.mxu0 0.0
    %408 = vmatprep.subr.mxu0 0.0
    %409 = vmatpush1.msra.mxu0 0.0
    %410 = vmatprep.subr.mxu0 0.0
    %411 = vmatpush1.msra.mxu0 0.0
    %412 = vmatprep.subr.mxu0 0.0
    %413 = vmatpush1.msra.mxu0 0.0
    %414 = vmatprep.subr.mxu0 0.0
    %415 = vmatpush1.msra.mxu0 0.0
    %416 = vmatprep.subr.mxu0 0.0
    %417 = vmatpush1.msra.mxu0 0.0
    %418 = vmatprep.subr.mxu0 0.0
    %419 = vmatpush1.msra.mxu0 0.0
    %420 = vmatprep.subr.mxu0 0.0
    %421 = vmatpush1.msra.mxu0 0.0
    %422 = vmatprep.subr.mxu0 0.0
    %423 = vmatpush1.msra.mxu0 0.0
    %424 = vmatprep.subr.mxu0 0.0
    %425 = vmatpush1.msra.mxu0 0.0
    %426 = vmatprep.subr.mxu0 0.0
    %427 = vmatpush1.msra.mxu0 0.0
    %428 = vmatprep.subr.mxu0 0.0
    %429 = vmatpush1.msra.mxu0 0.0
    %430 = vmatprep.subr.mxu0 0.0
    %431 = vmatpush1.msra.mxu0 0.0
    %432 = vmatprep.mubr.f32.mxu0 0.0
    %433 = vmatmul.mubr.f32.gmra.mrb[0].mxu0 %v346
    %v434 = vpop.f32.mrb[0].mxu0
    %v435 = vadd.f32 %v367, %v434
    %v436 = vpop.f32.mrb[0].mxu0
    %437 = vdwg.mxu0
    %v438 = vtanh.pop %v435
    %v439 = vlaneseq
    %v440 = vshrl.u32 %v439, 7
    %v441 = vsub.s32 4, %v440
    %v442 = vrot.slane %v53, %v441
    %v443 = vmul.f32 %v438, %v442
    %v444 = vlaneseq
    %v445 = vshrl.u32 %v444, 7
    %v446 = vsub.s32 5, %v445
    %v447 = vrot.slane %v53, %v446
    %v448 = vadd.f32 %v443, %v447
    %v449 = vadd.f32 %v448, %v234
    %450 = vst [vmem:[#allocation8] sm:$0xff] %v449
    // Predicated region
    $region26: #{tpu_custom_call.1} parent=1 // pred_check
      _
    $region27: #{tpu_custom_call.1} parent=1 // pred_check_branch
      %452 = sbr.rel (0) target = $region29
    $region28: #{tpu_custom_call.1} parent=1 // pred_region
      %s454 = ssub.s32 128, 128
      %455 = vsyncadd [#allocation4], %s454
      %s457 = sshll.u32 [#allocation8], 4
      %s458 = int_to_ptr.vmem [resolvable:$true] %s457
      %460 = dma.vmem_to_hbm [thread:$0]  %s458, 128, %s3, [#allocation4]
    $region29: #{tpu_custom_call.1} parent=1 // pred_fallthru
      _
    // Predicated region
    $region30: #{tpu_custom_call.1} parent=1 // pred_check
      _
    $region31: #{tpu_custom_call.1} parent=1 // pred_check_branch
      %462 = sbr.rel (0) target = $region33
    $region32: #{tpu_custom_call.1} parent=1 // pred_region
      %463 = dma.done [#allocation4], 128
    $region33: #{tpu_custom_call.1} parent=1 // pred_fallthru
      _
    %464 = vsyncpa [#allocation3], 1
    %465 = vsyncpa [#allocation6], 1
    %466 = vsyncpa [#allocation4], 1

</llo_original>
